<compile_context>
chip_gen: v7x
topology: tpu7x:2x2x1
jax: 0.10.0
libtpu: 0.0.40
codegen_flags: <defaults>
</compile_context>

<pallas_src>
import functools

import jax
import jax.numpy as jnp
import numpy as np
from jax import lax
from jax.experimental import pallas as pl
from jax.experimental.pallas import tpu as pltpu


def _round_up(n, m):
    return ((n + m - 1) // m) * m


def _vmem_limit_bytes():
    """Generation-aware scoped-VMEM limit: ~3/4 of physical, capped at 96 MiB.
    128 MiB parts (v5e/v6e) -> 96 MiB; 64 MiB parts (v7x) -> 48 MiB."""
    try:
        cap = int(pltpu.get_tpu_info().vmem_capacity_bytes)
    except Exception:
        cap = 64 * 1024 * 1024  # conservative (v7x-sized) fallback
    return max(32 * 1024 * 1024, min(cap * 3 // 4, 96 * 1024 * 1024))


def _choose_batch_tile(B, in_dim, hidden_dim, out_width, w_itemsize, vmem_limit):
    """Largest batch tile (multiple of 8) fitting a conservative VMEM budget,
    capped so the batch grid keeps >= ~4 steps (>= 2 per v7x TensorCore)."""
    if B < 8:
        return B  # single full-batch block (block dim == array dim is legal)
    budget = int(vmem_limit * 0.7)
    # Weights/biases are VMEM-resident; constant index_maps mean they are only
    # DMA'd once, but count them double-buffered to stay conservative.
    w_bytes = (2 * w_itemsize * (in_dim * hidden_dim + hidden_dim * out_width)
               + 2 * 4 * (hidden_dim + out_width))
    avail = max(budget - w_bytes, 0)
    tb = 8
    for cand in (1024, 512, 256, 128, 64, 32, 16, 8):
        # double-buffered x / output tiles (f32) + ~3 hidden-width f32 temps
        act_bytes = 4 * cand * (2 * in_dim + 2 * out_width + 3 * hidden_dim)
        if act_bytes <= avail:
            tb = cand
            break
    tb = min(tb, _round_up(pl.cdiv(B, 4), 8))  # keep the grid >= ~4 steps
    return tb


def mdn_kernel(x_ref, w1_ref, b1_ref, w2_ref, b2_ref, out_ref, *,
               half, matmul_dtype):
    # Layer 1: MXU dot with f32 accumulation; bias add in f32.
    h = jnp.dot(x_ref[...].astype(matmul_dtype), w1_ref[...],
                preferred_element_type=jnp.float32) + b1_ref[...]

    # ELU (alpha=1): h if h > 0 else expm1(h).  exp(min(h, 0)) keeps large
    # positive lanes finite; the 3rd-order Taylor guard avoids exp(h)-1
    # cancellation for tiny |h|.  exp rides the (otherwise idle) EUP slot.
    hn = jnp.minimum(h, 0.0)
    em1 = jnp.where(hn > -1e-2,
                    hn + 0.5 * hn * hn * (1.0 + hn * (1.0 / 3.0)),
                    jnp.exp(hn) - 1.0)
    h = jnp.where(h > 0, h, em1)

    # Layer 2: ONE fused dot over the [mean | log-sd] weight, then exp only the
    # sd columns (iota column mask); single lane-contiguous output store.
    p = jnp.dot(h.astype(matmul_dtype), w2_ref[...],
                preferred_element_type=jnp.float32) + b2_ref[...]
    is_sd = lax.broadcasted_iota(jnp.int32, p.shape, 1) >= half
    out_ref[...] = jnp.where(is_sd, jnp.exp(jnp.where(is_sd, p, 0.0)), p
                             ).astype(out_ref.dtype)


@functools.partial(jax.jit,
                   static_argnames=("n_components", "out_dim", "matmul_dtype"))
def mixture_diag_normal_forward(x, w1, b1, w2, b2, *, n_components, out_dim,
                                matmul_dtype=jnp.float32):
    """Returns (mean, scale), each (B, n_components, out_dim) -- the parameters
    of the Normal distribution produced by the PyTorch module."""
    B, in_dim = x.shape
    hidden_dim = w1.shape[1]
    two_half = w2.shape[1]
    half = two_half // 2
    assert half == n_components * out_dim

    # Cheap prep (no-ops if prepare_params was used); everything fuses under jit.
    w1 = w1.astype(matmul_dtype)
    w2 = w2.astype(matmul_dtype)
    b1 = b1.reshape(1, hidden_dim).astype(jnp.float32)
    b2 = b2.reshape(1, two_half).astype(jnp.float32)

    vmem_limit = _vmem_limit_bytes()
    tb = _choose_batch_tile(B, in_dim, hidden_dim, two_half,
                            np.dtype(matmul_dtype).itemsize, vmem_limit)
    grid = (pl.cdiv(B, tb),)  # partial last block -> no batch padding/slicing

    cost = pl.CostEstimate(
        flops=2 * B * (in_dim * hidden_dim + hidden_dim * two_half),
        transcendentals=B * (hidden_dim + two_half),
        bytes_accessed=(x.dtype.itemsize * B * in_dim
                        + w1.dtype.itemsize * in_dim * hidden_dim
                        + w2.dtype.itemsize * hidden_dim * two_half
                        + 4 * (hidden_dim + two_half)
                        + 4 * B * two_half),
    )

    params = pl.pallas_call(
        functools.partial(mdn_kernel, half=half, matmul_dtype=matmul_dtype),
        grid=grid,
        in_specs=[
            pl.BlockSpec((tb, in_dim), lambda i: (i, 0)),            # x tile
            pl.BlockSpec((in_dim, hidden_dim), lambda i: (0, 0)),    # w1 (resident)
            pl.BlockSpec((1, hidden_dim), lambda i: (0, 0)),         # b1
            pl.BlockSpec((hidden_dim, two_half), lambda i: (0, 0)),  # w2 [mean|log-sd]
            pl.BlockSpec((1, two_half), lambda i: (0, 0)),           # b2
        ],
        out_specs=pl.BlockSpec((tb, two_half), lambda i: (i, 0)),
        out_shape=jax.ShapeDtypeStruct((B, two_half), jnp.float32),
        compiler_params=pltpu.CompilerParams(
            dimension_semantics=("parallel",),
            vmem_limit_bytes=vmem_limit,
        ),
        cost_estimate=cost,
    )(x, w1, b1, w2, b2)

    # torch: split columns into mean / sd halves, split each into n_components
    # chunks of out_dim, stack, transpose(0,1) == reshape(B, n_components, out_dim).
    mean = params[:, :half].reshape(B, n_components, out_dim)
    scale = params[:, half:].reshape(B, n_components, out_dim)
    return mean, scale


def prepare_params(w1, b1, w2, b2, matmul_dtype=jnp.bfloat16):
    """Cast matmul weights to the MXU operand dtype ONCE at init time.
    Biases stay f32 (bias add / ELU / exp run in f32 in-kernel)."""
    return (jnp.asarray(w1, matmul_dtype), jnp.asarray(b1, jnp.float32),
            jnp.asarray(w2, matmul_dtype), jnp.asarray(b2, jnp.float32))


def init_params(key, in_dim, hidden_dim, out_dim, n_components):
    """Mimics nn.Linear's U(-1/sqrt(fan_in), 1/sqrt(fan_in)) init.
    Weights are stored transposed vs. PyTorch (x @ W + b layout)."""
    k1, k2, k3, k4 = jax.random.split(key, 4)
    lim1 = 1.0 / np.sqrt(in_dim)
    lim2 = 1.0 / np.sqrt(hidden_dim)
    two_half = 2 * out_dim * n_components
    w1 = jax.random.uniform(k1, (in_dim, hidden_dim), jnp.float32, -lim1, lim1)
    b1 = jax.random.uniform(k2, (hidden_dim,), jnp.float32, -lim1, lim1)
    w2 = jax.random.uniform(k3, (hidden_dim, two_half), jnp.float32, -lim2, lim2)
    b2 = jax.random.uniform(k4, (two_half,), jnp.float32, -lim2, lim2)
    return w1, b1, w2, b2


if __name__ == "__main__":
    # Small shapes consistent with the module's forward pass.  B is not a
    # multiple of 8 to exercise the partial-last-block path.
    B, in_dim, hidden_dim = 10, 16, 32
    out_dim, n_components = 4, 3
    half = out_dim * n_components

    key = jax.random.PRNGKey(0)
    kx, kp = jax.random.split(key)
    x = jax.random.normal(kx, (B, in_dim), jnp.float32)
    w1, b1, w2, b2 = init_params(kp, in_dim, hidden_dim, out_dim, n_components)

    # Pure-JAX reference of the same forward math (true expm1, like torch).
    h_ref = x @ w1 + b1
    h_ref = jnp.where(h_ref > 0, h_ref, jnp.expm1(h_ref))
    p_ref = h_ref @ w2 + b2
    mean_ref = p_ref[:, :half].reshape(B, n_components, out_dim)
    scale_ref = jnp.exp(p_ref[:, half:]).reshape(B, n_components, out_dim)

    # 1) Exact-precision path (f32 matmul operands) -- matches torch semantics.
    mean32, scale32 = mixture_diag_normal_forward(
        x, w1, b1, w2, b2, n_components=n_components, out_dim=out_dim,
        matmul_dtype=jnp.float32)
    jax.block_until_ready((mean32, scale32))
    assert mean32.shape == (B, n_components, out_dim)
    assert scale32.shape == (B, n_components, out_dim)
    np.testing.assert_allclose(np.asarray(mean32), np.asarray(mean_ref),
                               rtol=1e-5, atol=1e-5)
    np.testing.assert_allclose(np.asarray(scale32), np.asarray(scale_ref),
                               rtol=1e-5, atol=1e-5)

    # 2) Fast path (bf16 MXU operands, recommended on v6e/v7x): weights
    #    pre-cast once, x/h cast in-kernel; elementwise math stays f32.
    w1b, b1b, w2b, b2b = prepare_params(w1, b1, w2, b2, jnp.bfloat16)
    meanbf, scalebf = mixture_diag_normal_forward(
        x, w1b, b1b, w2b, b2b, n_components=n_components, out_dim=out_dim,
        matmul_dtype=jnp.bfloat16)
    jax.block_until_ready((meanbf, scalebf))
    np.testing.assert_allclose(np.asarray(meanbf), np.asarray(mean_ref),
                               rtol=1e-1, atol=1e-1)
    np.testing.assert_allclose(np.asarray(scalebf), np.asarray(scale_ref),
                               rtol=1e-1, atol=1e-1)

    print("KERNEL_OK")
</pallas_src>

<mosaic_0001>
module attributes {stable_mosaic.version = 11 : i64} {
  func.func @mdn_kernel(%arg0: i32, %arg1: memref<8x16xf32, #tpu.memory_space<vmem>>, %arg2: memref<16x32xf32, #tpu.memory_space<vmem>>, %arg3: memref<1x32xf32, #tpu.memory_space<vmem>>, %arg4: memref<32x24xf32, #tpu.memory_space<vmem>>, %arg5: memref<1x24xf32, #tpu.memory_space<vmem>>, %arg6: memref<8x24xf32, #tpu.memory_space<vmem>>) attributes {dimension_semantics = [#tpu.dimension_semantics<parallel>], iteration_bounds = array<i64: 2>, scalar_prefetch = 0 : i64, scratch_operands = 0 : i64, tpu.core_type = #tpu.core_type<tc>, window_params = [{transform_indices = @transform_0, window_bounds = array<i64: 8, 16>}, {pipeline_mode = #tpu.pipeline_mode<synchronous>, transform_indices = @transform_1, window_bounds = array<i64: 16, 32>}, {pipeline_mode = #tpu.pipeline_mode<synchronous>, transform_indices = @transform_2, window_bounds = array<i64: 1, 32>}, {pipeline_mode = #tpu.pipeline_mode<synchronous>, transform_indices = @transform_3, window_bounds = array<i64: 32, 24>}, {pipeline_mode = #tpu.pipeline_mode<synchronous>, transform_indices = @transform_4, window_bounds = array<i64: 1, 24>}, {transform_indices = @transform_5, window_bounds = array<i64: 8, 24>}]} {
    %c0 = arith.constant 0 : index
    %c0_0 = arith.constant 0 : index
    %0 = vector.load %arg1[%c0, %c0_0] : memref<8x16xf32, #tpu.memory_space<vmem>>, vector<8x16xf32>
    %c0_1 = arith.constant 0 : index
    %c0_2 = arith.constant 0 : index
    %1 = vector.load %arg2[%c0_1, %c0_2] : memref<16x32xf32, #tpu.memory_space<vmem>>, vector<16x32xf32>
    %cst = arith.constant dense<0.000000e+00> : vector<8x32xf32>
    %2 = tpu.matmul %0, %1, %cst {dimension_numbers = #tpu.dot_dimension_numbers<[1], [0], [0], [1], [0, 0, 1, 1], [], []>} : vector<8x16xf32>, vector<16x32xf32>, vector<8x32xf32> -> vector<8x32xf32>
    %c0_3 = arith.constant 0 : index
    %c0_4 = arith.constant 0 : index
    %3 = vector.load %arg3[%c0_3, %c0_4] : memref<1x32xf32, #tpu.memory_space<vmem>>, vector<1x32xf32>
    %4 = vector.broadcast %3 : vector<1x32xf32> to vector<8x32xf32>
    %5 = arith.addf %2, %4 : vector<8x32xf32>
    %cst_5 = arith.constant 0.000000e+00 : f32
    %6 = vector.broadcast %cst_5 : f32 to vector<8x32xf32>
    %7 = arith.minimumf %5, %6 : vector<8x32xf32>
    %cst_6 = arith.constant -0.00999999977 : f32
    %8 = vector.broadcast %cst_6 : f32 to vector<8x32xf32>
    %9 = arith.cmpf ogt, %7, %8 : vector<8x32xf32>
    %cst_7 = arith.constant 5.000000e-01 : f32
    %10 = vector.broadcast %cst_7 : f32 to vector<8x32xf32>
    %11 = arith.mulf %10, %7 : vector<8x32xf32>
    %12 = arith.mulf %11, %7 : vector<8x32xf32>
    %cst_8 = arith.constant 0.333333343 : f32
    %13 = vector.broadcast %cst_8 : f32 to vector<8x32xf32>
    %14 = arith.mulf %7, %13 : vector<8x32xf32>
    %cst_9 = arith.constant 1.000000e+00 : f32
    %15 = vector.broadcast %cst_9 : f32 to vector<8x32xf32>
    %16 = arith.addf %15, %14 : vector<8x32xf32>
    %17 = arith.mulf %12, %16 : vector<8x32xf32>
    %18 = arith.addf %7, %17 : vector<8x32xf32>
    %19 = math.exp %7 : vector<8x32xf32>
    %cst_10 = arith.constant 1.000000e+00 : f32
    %20 = vector.broadcast %cst_10 : f32 to vector<8x32xf32>
    %21 = arith.subf %19, %20 : vector<8x32xf32>
    %22 = arith.select %9, %18, %21 : vector<8x32xi1>, vector<8x32xf32>
    %cst_11 = arith.constant 0.000000e+00 : f32
    %23 = vector.broadcast %cst_11 : f32 to vector<8x32xf32>
    %24 = arith.cmpf ogt, %5, %23 : vector<8x32xf32>
    %25 = arith.select %24, %5, %22 : vector<8x32xi1>, vector<8x32xf32>
    %c0_12 = arith.constant 0 : index
    %c0_13 = arith.constant 0 : index
    %26 = vector.load %arg4[%c0_12, %c0_13] : memref<32x24xf32, #tpu.memory_space<vmem>>, vector<32x24xf32>
    %cst_14 = arith.constant dense<0.000000e+00> : vector<8x24xf32>
    %27 = tpu.matmul %25, %26, %cst_14 {dimension_numbers = #tpu.dot_dimension_numbers<[1], [0], [0], [1], [0, 0, 1, 1], [], []>} : vector<8x32xf32>, vector<32x24xf32>, vector<8x24xf32> -> vector<8x24xf32>
    %c0_15 = arith.constant 0 : index
    %c0_16 = arith.constant 0 : index
    %28 = vector.load %arg5[%c0_15, %c0_16] : memref<1x24xf32, #tpu.memory_space<vmem>>, vector<1x24xf32>
    %29 = vector.broadcast %28 : vector<1x24xf32> to vector<8x24xf32>
    %30 = arith.addf %27, %29 : vector<8x24xf32>
    %31 = tpu.iota {dimensions = array<i32: 1>} : vector<8x24xi32>
    %c12_i32 = arith.constant 12 : i32
    %32 = vector.broadcast %c12_i32 : i32 to vector<8x24xi32>
    %33 = arith.cmpi sge, %31, %32 : vector<8x24xi32>
    %cst_17 = arith.constant 0.000000e+00 : f32
    %34 = vector.broadcast %cst_17 : f32 to vector<8x24xf32>
    %35 = arith.select %33, %30, %34 : vector<8x24xi1>, vector<8x24xf32>
    %36 = math.exp %35 : vector<8x24xf32>
    %37 = arith.select %33, %36, %30 : vector<8x24xi1>, vector<8x24xf32>
    %c0_18 = arith.constant 0 : index
    %c0_19 = arith.constant 0 : index
    %38 = vector.load %arg6[%c0_18, %c0_19] : memref<8x24xf32, #tpu.memory_space<vmem>>, vector<8x24xf32>
    tpu.vector_store %arg6[%c0_18, %c0_19], %37 {strides = array<i32>} : memref<8x24xf32, #tpu.memory_space<vmem>>, vector<8x24xf32>,
    return
  }
  func.func @transform_0(%arg0: i32) -> (i32, i32) {
    %c0_i32 = arith.constant 0 : i32
    %c0_i32_0 = arith.constant 0 : i32
    return %arg0, %c0_i32 : i32, i32
  }
  func.func @transform_1(%arg0: i32) -> (i32, i32) {
    %c0_i32 = arith.constant 0 : i32
    %c0_i32_0 = arith.constant 0 : i32
    %c0_i32_1 = arith.constant 0 : i32
    return %c0_i32, %c0_i32_0 : i32, i32
  }
  func.func @transform_2(%arg0: i32) -> (i32, i32) {
    %c0_i32 = arith.constant 0 : i32
    %c0_i32_0 = arith.constant 0 : i32
    %c0_i32_1 = arith.constant 0 : i32
    return %c0_i32, %c0_i32_0 : i32, i32
  }
  func.func @transform_3(%arg0: i32) -> (i32, i32) {
    %c0_i32 = arith.constant 0 : i32
    %c0_i32_0 = arith.constant 0 : i32
    %c0_i32_1 = arith.constant 0 : i32
    return %c0_i32, %c0_i32_0 : i32, i32
  }
  func.func @transform_4(%arg0: i32) -> (i32, i32) {
    %c0_i32 = arith.constant 0 : i32
    %c0_i32_0 = arith.constant 0 : i32
    %c0_i32_1 = arith.constant 0 : i32
    return %c0_i32, %c0_i32_0 : i32, i32
  }
  func.func @transform_5(%arg0: i32) -> (i32, i32) {
    %c0_i32 = arith.constant 0 : i32
    %c0_i32_0 = arith.constant 0 : i32
    return %arg0, %c0_i32 : i32, i32
  }
}

</mosaic_0001>

<llo_original>
// kernel: mixture_diag_normal_forward.1
$region0: #{mixture_diag_normal_forward.1}
  #allocation0 [shape = 'u32[]', space=smem, size = 0x4, offset = 0x4, fixed_abs, tag = 'smem constant byte address 0x4 - core index']
  #allocation1 [shape = 'u32[144,128]{1,0:T(1,128)}', space=vmem, size = 0x12000, scoped, tag = 'internal scratch']
  %s0 = inlined_call_operand.vmem [shape: f32[10,16], index: 0, kind: input, shape index: {}]
  %s1 = inlined_call_operand.vmem [shape: f32[16,32], index: 1, kind: input, shape index: {}]
  %s2 = inlined_call_operand.vmem [shape: f32[1,32], index: 2, kind: input, shape index: {}]
  %s3 = inlined_call_operand.vmem [shape: f32[32,24], index: 3, kind: input, shape index: {}]
  %s4 = inlined_call_operand.vmem [shape: f32[1,24], index: 4, kind: input, shape index: {}]
  %s5 = inlined_call_operand.vmem [shape: f32[10,24], index: 5, kind: output, shape index: {}]
  %s6 = sld [smem:[#allocation0]]
  $region53: #{mixture_diag_normal_forward.1} parent=0
    _
  %s8 = ssub.s32 1, %s6
  %s9 = scalar_select 0, %s8, %s6
  loop: start=0, step=1, limit=4
  $region2: #{mixture_diag_normal_forward.1} parent=0 // loop_pre_header
    _
  $region3: #{mixture_diag_normal_forward.1} parent=0 // loop_header
    %s11 = sphi 0, %s15
    %p12 = scmp.ge.s32.totalorder %s11, 4
    %s21 = sphi 0, %s23
    %s24 = sphi 0, %s21
    %s25 = sphi 0, %s24
    %s41 = sphi 0, %s25
    %s45 = sphi 0, %s45
    %s47 = sphi 0, %s45
    %s48 = sphi 0, %s47
    %s62 = sphi 0, %s48
    %s66 = sphi 0, %s66
    %s68 = sphi 0, %s66
    %s69 = sphi 0, %s68
    %s83 = sphi 0, %s69
    %s87 = sphi 0, %s87
    %s89 = sphi 0, %s87
    %s90 = sphi 0, %s89
    %s104 = sphi 0, %s90
    %s108 = sphi 0, %s108
    %s110 = sphi 0, %s108
    %s111 = sphi 0, %s110
    %s125 = sphi 0, %s111
    %s131 = sphi 0, %s133
    %s134 = sphi 0, %s131
    %s135 = sphi 0, %s134
    %s151 = sphi 0, %s135
  $region4: #{mixture_diag_normal_forward.1} parent=0 // loop_header_branch
    %14 = sbr.rel (%p12) target = $region8
  $region5: #{mixture_diag_normal_forward.1} parent=0 // loop_body
    %s16 = ssub.s32 %s11, 1
    %s17 = ssub.s32 %s11, 2
    %s18 = sadd.s32 %s11, 1
    %s19 = ssub.s32 %s11, %s18
    %p20 = scmp.eq.s32.totalorder %s19, 0
    %s22 = sadd.s32 %s21, 1
    %s23 = scalar_select %p20, %s21, %s22
    %p26 = pneg %p20
    %p27 = scmp.eq.s32.totalorder %s11, 1
    %p28 = por %p26, %p27
    %p29 = scmp.ne.s32.totalorder %s21, %s24
    %p30 = scmp.eq.s32.totalorder %s11, 0
    %p31 = por %p29, %p30
    %p32 = scmp.ne.s32.totalorder %s21, %s24
    %p33 = scmp.eq.s32.totalorder %s16, 1
    %p34 = por %p32, %p33
    %p35 = scmp.ne.s32.totalorder %s24, %s25
    %p36 = scmp.eq.s32.totalorder %s16, 0
    %p37 = por %p35, %p36
    %p38 = scmp.ne.s32.totalorder %s24, %s25
    %p39 = scmp.eq.s32.totalorder %s17, 1
    %p40 = por %p38, %p39
    %p42 = scmp.ne.s32.totalorder %s25, %s41
    %p43 = scmp.eq.s32.totalorder %s17, 0
    %p44 = por %p42, %p43
    %s46 = sadd.s32 %s45, 1
    %p49 = scmp.eq.s32.totalorder %s11, 1
    %p50 = scmp.ne.s32.totalorder %s45, %s47
    %p51 = scmp.eq.s32.totalorder %s11, 0
    %p52 = por %p50, %p51
    %p53 = scmp.ne.s32.totalorder %s45, %s47
    %p54 = scmp.eq.s32.totalorder %s16, 1
    %p55 = por %p53, %p54
    %p56 = scmp.ne.s32.totalorder %s47, %s48
    %p57 = scmp.eq.s32.totalorder %s16, 0
    %p58 = por %p56, %p57
    %p59 = scmp.ne.s32.totalorder %s47, %s48
    %p60 = scmp.eq.s32.totalorder %s17, 1
    %p61 = por %p59, %p60
    %p63 = scmp.ne.s32.totalorder %s48, %s62
    %p64 = scmp.eq.s32.totalorder %s17, 0
    %p65 = por %p63, %p64
    %s67 = sadd.s32 %s66, 1
    %p70 = scmp.eq.s32.totalorder %s11, 1
    %p71 = scmp.ne.s32.totalorder %s66, %s68
    %p72 = scmp.eq.s32.totalorder %s11, 0
    %p73 = por %p71, %p72
    %p74 = scmp.ne.s32.totalorder %s66, %s68
    %p75 = scmp.eq.s32.totalorder %s16, 1
    %p76 = por %p74, %p75
    %p77 = scmp.ne.s32.totalorder %s68, %s69
    %p78 = scmp.eq.s32.totalorder %s16, 0
    %p79 = por %p77, %p78
    %p80 = scmp.ne.s32.totalorder %s68, %s69
    %p81 = scmp.eq.s32.totalorder %s17, 1
    %p82 = por %p80, %p81
    %p84 = scmp.ne.s32.totalorder %s69, %s83
    %p85 = scmp.eq.s32.totalorder %s17, 0
    %p86 = por %p84, %p85
    %s88 = sadd.s32 %s87, 1
    %p91 = scmp.eq.s32.totalorder %s11, 1
    %p92 = scmp.ne.s32.totalorder %s87, %s89
    %p93 = scmp.eq.s32.totalorder %s11, 0
    %p94 = por %p92, %p93
    %p95 = scmp.ne.s32.totalorder %s87, %s89
    %p96 = scmp.eq.s32.totalorder %s16, 1
    %p97 = por %p95, %p96
    %p98 = scmp.ne.s32.totalorder %s89, %s90
    %p99 = scmp.eq.s32.totalorder %s16, 0
    %p100 = por %p98, %p99
    %p101 = scmp.ne.s32.totalorder %s89, %s90
    %p102 = scmp.eq.s32.totalorder %s17, 1
    %p103 = por %p101, %p102
    %p105 = scmp.ne.s32.totalorder %s90, %s104
    %p106 = scmp.eq.s32.totalorder %s17, 0
    %p107 = por %p105, %p106
    %s109 = sadd.s32 %s108, 1
    %p112 = scmp.eq.s32.totalorder %s11, 1
    %p113 = scmp.ne.s32.totalorder %s108, %s110
    %p114 = scmp.eq.s32.totalorder %s11, 0
    %p115 = por %p113, %p114
    %p116 = scmp.ne.s32.totalorder %s108, %s110
    %p117 = scmp.eq.s32.totalorder %s16, 1
    %p118 = por %p116, %p117
    %p119 = scmp.ne.s32.totalorder %s110, %s111
    %p120 = scmp.eq.s32.totalorder %s16, 0
    %p121 = por %p119, %p120
    %p122 = scmp.ne.s32.totalorder %s110, %s111
    %p123 = scmp.eq.s32.totalorder %s17, 1
    %p124 = por %p122, %p123
    %p126 = scmp.ne.s32.totalorder %s111, %s125
    %p127 = scmp.eq.s32.totalorder %s17, 0
    %p128 = por %p126, %p127
    %s129 = ssub.s32 %s11, %s18
    %p130 = scmp.eq.s32.totalorder %s129, 0
    %s132 = sadd.s32 %s131, 1
    %s133 = scalar_select %p130, %s131, %s132
    %p136 = pneg %p130
    %p137 = scmp.eq.s32.totalorder %s11, 1
    %p138 = por %p136, %p137
    %p139 = scmp.ne.s32.totalorder %s131, %s134
    %p140 = scmp.eq.s32.totalorder %s11, 0
    %p141 = por %p139, %p140
    %p142 = scmp.ne.s32.totalorder %s131, %s134
    %p143 = scmp.eq.s32.totalorder %s16, 1
    %p144 = por %p142, %p143
    %p145 = scmp.ne.s32.totalorder %s134, %s135
    %p146 = scmp.eq.s32.totalorder %s16, 0
    %p147 = por %p145, %p146
    %p148 = scmp.ne.s32.totalorder %s134, %s135
    %p149 = scmp.eq.s32.totalorder %s17, 1
    %p150 = por %p148, %p149
    %p152 = scmp.ne.s32.totalorder %s135, %s151
    %p153 = scmp.eq.s32.totalorder %s17, 0
    %p154 = por %p152, %p153
    %p155 = scmp.le.s32.totalorder 1, %s11
    %p156 = scmp.lt.s32.totalorder %s11, 3
    %p157 = pnand %p155, %p156
    %p158 = pneg %p157
    // Predicated region
    $region9: #{mixture_diag_normal_forward.1} parent=5 // pred_check
      _
    $region10: #{mixture_diag_normal_forward.1} parent=5 // pred_check_branch
      %160 = sbr.rel (%p157) target = $region12
    $region11: #{mixture_diag_normal_forward.1} parent=5 // pred_region
      %s161 = ssub.s32 %s11, 1
      // Predicated region
      $region13: #{mixture_diag_normal_forward.1} parent=11 // pred_check
        %p162 = pneg %p58
      $region14: #{mixture_diag_normal_forward.1} parent=11 // pred_check_branch
        %164 = sbr.rel (%p162) target = $region16
      $region15: #{mixture_diag_normal_forward.1} parent=11 // pred_region
        _
      $region16: #{mixture_diag_normal_forward.1} parent=11 // pred_fallthru
        _
      // Predicated region
      $region17: #{mixture_diag_normal_forward.1} parent=11 // pred_check
        %p165 = pneg %p79
      $region18: #{mixture_diag_normal_forward.1} parent=11 // pred_check_branch
        %167 = sbr.rel (%p165) target = $region20
      $region19: #{mixture_diag_normal_forward.1} parent=11 // pred_region
        _
      $region20: #{mixture_diag_normal_forward.1} parent=11 // pred_fallthru
        _
      // Predicated region
      $region21: #{mixture_diag_normal_forward.1} parent=11 // pred_check
        %p168 = pneg %p100
      $region22: #{mixture_diag_normal_forward.1} parent=11 // pred_check_branch
        %170 = sbr.rel (%p168) target = $region24
      $region23: #{mixture_diag_normal_forward.1} parent=11 // pred_region
        _
      $region24: #{mixture_diag_normal_forward.1} parent=11 // pred_fallthru
        _
      // Predicated region
      $region25: #{mixture_diag_normal_forward.1} parent=11 // pred_check
        %p171 = pneg %p121
      $region26: #{mixture_diag_normal_forward.1} parent=11 // pred_check_branch
        %173 = sbr.rel (%p171) target = $region28
      $region27: #{mixture_diag_normal_forward.1} parent=11 // pred_region
        _
      $region28: #{mixture_diag_normal_forward.1} parent=11 // pred_fallthru
        _
    $region12: #{mixture_diag_normal_forward.1} parent=5 // pred_fallthru
      _
    %p174 = scmp.lt.s32.totalorder %s11, 2
    // Predicated region
    $region29: #{mixture_diag_normal_forward.1} parent=5 // pred_check
      %p175 = pneg %p174
    $region30: #{mixture_diag_normal_forward.1} parent=5 // pred_check_branch
      %177 = sbr.rel (%p175) target = $region32
    $region31: #{mixture_diag_normal_forward.1} parent=5 // pred_region
      // Predicated region
      $region33: #{mixture_diag_normal_forward.1} parent=31 // pred_check
        %p178 = pneg %p31
      $region34: #{mixture_diag_normal_forward.1} parent=31 // pred_check_branch
        %180 = sbr.rel (%p178) target = $region36
      $region35: #{mixture_diag_normal_forward.1} parent=31 // pred_region
        %p181 = scmp.lt.s32.totalorder %s11, 1
        %s182 = scalar_select %p181, %s11, 1
        %s183 = smul.addr %s182, 8
        %s184 = scalar_lea.vmem %s0, %s183
      $region36: #{mixture_diag_normal_forward.1} parent=31 // pred_fallthru
        _
    $region32: #{mixture_diag_normal_forward.1} parent=5 // pred_fallthru
      _
    %p185 = scmp.le.s32.totalorder 1, %s11
    %p186 = scmp.lt.s32.totalorder %s11, 3
    %p187 = pnand %p185, %p186
    %p188 = pneg %p187
    // Predicated region
    $region37: #{mixture_diag_normal_forward.1} parent=5 // pred_check
      _
    $region38: #{mixture_diag_normal_forward.1} parent=5 // pred_check_branch
      %190 = sbr.rel (%p187) target = $region40
    $region39: #{mixture_diag_normal_forward.1} parent=5 // pred_region
      %s191 = ssub.s32 %s11, 1
      %p192 = scmp.lt.s32.totalorder %s16, 1
      %s193 = scalar_select %p192, %s16, 1
      %s194 = smul.addr %s193, 8
      %s195 = scalar_lea.vmem %s0, %s194
      %p196 = pneg %p37
      %p197 = pneg %p34
      %p198 = pneg %p58
      %p199 = pneg %p55
      %p200 = pneg %p79
      %p201 = pneg %p76
      %p202 = pneg %p100
      %p203 = pneg %p97
      %p204 = pneg %p121
      %p205 = pneg %p118
      %p206 = pneg %p147
      %p207 = pneg %p144
      %p208 = scmp.lt.s32.totalorder %s16, 1
      %s209 = scalar_select %p208, %s16, 1
      %s210 = smul.addr %s209, 8
      %s211 = scalar_lea.vmem %s5, %s210
      %p212 = scmp.lt.s32.totalorder %s16, 1
      %s213 = scalar_select %p212, %s16, 1
      %s214 = smul.addr %s213, 8
      %s215 = scalar_lea.vmem %s0, %s214
      %p216 = scmp.lt.s32.totalorder %s16, 1
      %s217 = scalar_select %p216, %s16, 1
      %s218 = smul.addr %s217, 8
      %s219 = scalar_lea.vmem %s5, %s218
      %v220 = vld [vmem:[%s215] sm:$0xff]
      %v221 = vld [vmem:[%s1] sm:$0xff]
      %v222 = vld [vmem:[%s1 + $0x8] sm:$0xff]
      %v223 = vld [vmem:[%s2] sm:$0x1]
      %v225 = vlaneseq
      %v226 = vshrl.u32 %v225, 7
      %v227 = vsub.s32 0, %v226
      %v228 = vrot.slane %v223, %v227
      %vm230 = vcmask 130048
      %v232 = vsel %vm230, %v220, 0
      %234 = vmatprep.subr.mxu0 0.0
      %235 = vmatpush1.msra.mxu0 %v221
      %236 = vmatprep.subr.mxu0 0.0
      %237 = vmatpush1.msra.mxu0 %v222
      %238 = vmatprep.subr.mxu0 0.0
      %239 = vmatpush1.msra.mxu0 0.0
      %240 = vmatprep.subr.mxu0 0.0
      %241 = vmatpush1.msra.mxu0 0.0
      %242 = vmatprep.subr.mxu0 0.0
      %243 = vmatpush1.msra.mxu0 0.0
      %244 = vmatprep.subr.mxu0 0.0
      %245 = vmatpush1.msra.mxu0 0.0
      %246 = vmatprep.subr.mxu0 0.0
      %247 = vmatpush1.msra.mxu0 0.0
      %248 = vmatprep.subr.mxu0 0.0
      %249 = vmatpush1.msra.mxu0 0.0
      %250 = vmatprep.subr.mxu0 0.0
      %251 = vmatpush1.msra.mxu0 0.0
      %252 = vmatprep.subr.mxu0 0.0
      %253 = vmatpush1.msra.mxu0 0.0
      %254 = vmatprep.subr.mxu0 0.0
      %255 = vmatpush1.msra.mxu0 0.0
      %256 = vmatprep.subr.mxu0 0.0
      %257 = vmatpush1.msra.mxu0 0.0
      %258 = vmatprep.subr.mxu0 0.0
      %259 = vmatpush1.msra.mxu0 0.0
      %260 = vmatprep.subr.mxu0 0.0
      %261 = vmatpush1.msra.mxu0 0.0
      %262 = vmatprep.subr.mxu0 0.0
      %263 = vmatpush1.msra.mxu0 0.0
      %264 = vmatprep.subr.mxu0 0.0
      %265 = vmatpush1.msra.mxu0 0.0
      %266 = vmatprep.subr.mxu0 0.0
      %267 = vmatpush1.msra.mxu0 0.0
      %268 = vmatprep.subr.mxu0 0.0
      %269 = vmatpush1.msra.mxu0 0.0
      %270 = vmatprep.subr.mxu0 0.0
      %271 = vmatpush1.msra.mxu0 0.0
      %272 = vmatprep.subr.mxu0 0.0
      %273 = vmatpush1.msra.mxu0 0.0
      %274 = vmatprep.subr.mxu0 0.0
      %275 = vmatpush1.msra.mxu0 0.0
      %276 = vmatprep.subr.mxu0 0.0
      %277 = vmatpush1.msra.mxu0 0.0
      %278 = vmatprep.subr.mxu0 0.0
      %279 = vmatpush1.msra.mxu0 0.0
      %280 = vmatprep.subr.mxu0 0.0
      %281 = vmatpush1.msra.mxu0 0.0
      %282 = vmatprep.subr.mxu0 0.0
      %283 = vmatpush1.msra.mxu0 0.0
      %284 = vmatprep.subr.mxu0 0.0
      %285 = vmatpush1.msra.mxu0 0.0
      %286 = vmatprep.subr.mxu0 0.0
      %287 = vmatpush1.msra.mxu0 0.0
      %288 = vmatprep.subr.mxu0 0.0
      %289 = vmatpush1.msra.mxu0 0.0
      %290 = vmatprep.subr.mxu0 0.0
      %291 = vmatpush1.msra.mxu0 0.0
      %292 = vmatprep.subr.mxu0 0.0
      %293 = vmatpush1.msra.mxu0 0.0
      %294 = vmatprep.subr.mxu0 0.0
      %295 = vmatpush1.msra.mxu0 0.0
      %296 = vmatprep.subr.mxu0 0.0
      %297 = vmatpush1.msra.mxu0 0.0
      %298 = vmatprep.mubr.f32.mxu0 0.0
      %299 = vmatmul.mubr.f32.gmra.mrb[0].mxu0 %v232
      %v300 = vpop.f32.mrb[0].mxu0
      %v301 = vadd.f32 %v228, %v300
      %v302 = vpop.f32.mrb[0].mxu0
      %303 = vdwg.mxu0
      %v304 = vmin.f32 %v301, 0.0
      %vm305 = vcmp.gt.f32.partialorder %v304, -0.01
      %v306 = vmul.f32 %v304, 0.5
      %v307 = vmul.f32 %v306, %v304
      %v308 = vmul.f32 %v304, 0.33333334
      %v309 = vadd.f32 %v308, 1.0
      %v310 = vmul.f32 %v307, %v309
      %v311 = vadd.f32 %v304, %v310
      %v312 = vmul.f32 %v304, 1.442695
      %v313 = vpow.pop %v312
      %v314 = vsub.f32 %v313, 1.0
      %v315 = vsel %vm305, %v311, %v314
      %vm316 = vcmp.gt.f32.partialorder %v301, 0.0
      %v317 = vsel %vm316, %v301, %v315
      %v318 = vld [vmem:[%s3] sm:$0xff]
      %v319 = vld [vmem:[%s3 + $0x8] sm:$0xff]
      %v320 = vld [vmem:[%s3 + $0x10] sm:$0xff]
      %v321 = vld [vmem:[%s3 + $0x18] sm:$0xff]
      %v322 = vld [vmem:[%s4] sm:$0x1]
      %v324 = vlaneseq
      %v325 = vshrl.u32 %v324, 7
      %v326 = vsub.s32 0, %v325
      %v327 = vrot.slane %v322, %v326
      %vm329 = vcmask 261120
      %v331 = vsel %vm329, %v317, 0
      %333 = vmatprep.subr.mxu0 0.0
      %334 = vmatpush1.msra.mxu0 %v318
      %335 = vmatprep.subr.mxu0 0.0
      %336 = vmatpush1.msra.mxu0 %v319
      %337 = vmatprep.subr.mxu0 0.0
      %338 = vmatpush1.msra.mxu0 %v320
      %339 = vmatprep.subr.mxu0 0.0
      %340 = vmatpush1.msra.mxu0 %v321
      %341 = vmatprep.subr.mxu0 0.0
      %342 = vmatpush1.msra.mxu0 0.0
      %343 = vmatprep.subr.mxu0 0.0
      %344 = vmatpush1.msra.mxu0 0.0
      %345 = vmatprep.subr.mxu0 0.0
      %346 = vmatpush1.msra.mxu0 0.0
      %347 = vmatprep.subr.mxu0 0.0
      %348 = vmatpush1.msra.mxu0 0.0
      %349 = vmatprep.subr.mxu0 0.0
      %350 = vmatpush1.msra.mxu0 0.0
      %351 = vmatprep.subr.mxu0 0.0
      %352 = vmatpush1.msra.mxu0 0.0
      %353 = vmatprep.subr.mxu0 0.0
      %354 = vmatpush1.msra.mxu0 0.0
      %355 = vmatprep.subr.mxu0 0.0
      %356 = vmatpush1.msra.mxu0 0.0
      %357 = vmatprep.subr.mxu0 0.0
      %358 = vmatpush1.msra.mxu0 0.0
      %359 = vmatprep.subr.mxu0 0.0
      %360 = vmatpush1.msra.mxu0 0.0
      %361 = vmatprep.subr.mxu0 0.0
      %362 = vmatpush1.msra.mxu0 0.0
      %363 = vmatprep.subr.mxu0 0.0
      %364 = vmatpush1.msra.mxu0 0.0
      %365 = vmatprep.subr.mxu0 0.0
      %366 = vmatpush1.msra.mxu0 0.0
      %367 = vmatprep.subr.mxu0 0.0
      %368 = vmatpush1.msra.mxu0 0.0
      %369 = vmatprep.subr.mxu0 0.0
      %370 = vmatpush1.msra.mxu0 0.0
      %371 = vmatprep.subr.mxu0 0.0
      %372 = vmatpush1.msra.mxu0 0.0
      %373 = vmatprep.subr.mxu0 0.0
      %374 = vmatpush1.msra.mxu0 0.0
      %375 = vmatprep.subr.mxu0 0.0
      %376 = vmatpush1.msra.mxu0 0.0
      %377 = vmatprep.subr.mxu0 0.0
      %378 = vmatpush1.msra.mxu0 0.0
      %379 = vmatprep.subr.mxu0 0.0
      %380 = vmatpush1.msra.mxu0 0.0
      %381 = vmatprep.subr.mxu0 0.0
      %382 = vmatpush1.msra.mxu0 0.0
      %383 = vmatprep.subr.mxu0 0.0
      %384 = vmatpush1.msra.mxu0 0.0
      %385 = vmatprep.subr.mxu0 0.0
      %386 = vmatpush1.msra.mxu0 0.0
      %387 = vmatprep.subr.mxu0 0.0
      %388 = vmatpush1.msra.mxu0 0.0
      %389 = vmatprep.subr.mxu0 0.0
      %390 = vmatpush1.msra.mxu0 0.0
      %391 = vmatprep.subr.mxu0 0.0
      %392 = vmatpush1.msra.mxu0 0.0
      %393 = vmatprep.subr.mxu0 0.0
      %394 = vmatpush1.msra.mxu0 0.0
      %395 = vmatprep.subr.mxu0 0.0
      %396 = vmatpush1.msra.mxu0 0.0
      %397 = vmatprep.mubr.f32.mxu0 0.0
      %398 = vmatmul.mubr.f32.gmra.mrb[0].mxu0 %v331
      %v399 = vpop.f32.mrb[0].mxu0
      %v400 = vadd.f32 %v327, %v399
      %v401 = vpop.f32.mrb[0].mxu0
      %402 = vdwg.mxu0
      %v403 = vlaneseq
      %v404 = vand.u32 %v403, 127
      %vm405 = vcmp.ge.s32.totalorder %v404, 12
      %v406 = vsel %vm405, %v400, 0.0
      %v407 = vmul.f32 %v406, 1.442695
      %v408 = vpow.pop %v407
      %v409 = vsel %vm405, %v408, %v400
      %vm410 = vcmask 195584
      %411 = vst.msk [vmem:[%s219] sm:$0xff] %vm410, %v409
      %p412 = scmp.lt.s32.totalorder %s16, 1
      %s413 = scalar_select %p412, %s16, 1
      %s414 = smul.addr %s413, 8
      %s415 = scalar_lea.vmem %s5, %s414
      // Predicated region
      $region41: #{mixture_diag_normal_forward.1} parent=39 // pred_check
        %p416 = pneg %p144
      $region42: #{mixture_diag_normal_forward.1} parent=39 // pred_check_branch
        %418 = sbr.rel (%p416) target = $region44
      $region43: #{mixture_diag_normal_forward.1} parent=39 // pred_region
        _
      $region44: #{mixture_diag_normal_forward.1} parent=39 // pred_fallthru
        _
    $region40: #{mixture_diag_normal_forward.1} parent=5 // pred_fallthru
      _
    %p419 = scmp.le.s32.totalorder 2, %s11
    // Predicated region
    $region45: #{mixture_diag_normal_forward.1} parent=5 // pred_check
      %p420 = pneg %p419
    $region46: #{mixture_diag_normal_forward.1} parent=5 // pred_check_branch
      %422 = sbr.rel (%p420) target = $region48
    $region47: #{mixture_diag_normal_forward.1} parent=5 // pred_region
      %s423 = ssub.s32 %s11, 2
      // Predicated region
      $region49: #{mixture_diag_normal_forward.1} parent=47 // pred_check
        %p424 = pneg %p150
      $region50: #{mixture_diag_normal_forward.1} parent=47 // pred_check_branch
        %426 = sbr.rel (%p424) target = $region52
      $region51: #{mixture_diag_normal_forward.1} parent=47 // pred_region
        %p427 = scmp.lt.s32.totalorder %s17, 1
        %s428 = scalar_select %p427, %s17, 1
        %s429 = smul.addr %s428, 8
        %s430 = scalar_lea.vmem %s5, %s429
      $region52: #{mixture_diag_normal_forward.1} parent=47 // pred_fallthru
        _
    $region48: #{mixture_diag_normal_forward.1} parent=5 // pred_fallthru
      _
  $region6: #{mixture_diag_normal_forward.1} parent=0 // loop_footer
    %s15 = sadd.s32 1, %s11
  $region7: #{mixture_diag_normal_forward.1} parent=0 // loop_footer_branch
    %10 = sbr.rel target = $region3
  $region8: #{mixture_diag_normal_forward.1} parent=0 // loop_exit
    _

</llo_original>
